<compile_context>
chip_gen: v7x
topology: tpu7x:2x2x1
jax: 0.10.0
libtpu: 0.0.40
codegen_flags: <defaults>
</compile_context>

<pallas_src>
import jax
import jax.numpy as jnp
from jax.experimental import pallas as pl
from jax.experimental.pallas import tpu as pltpu

IN = 3       # observation dim (cos theta, sin theta, theta_dot)
IN_PAD = 8   # K padded to one sublane tile for the MXU layer-1 path
H = 256      # hidden width
OUT = 1      # action dim


# ----------------------------------------------------------------------------
# Kernels
# ----------------------------------------------------------------------------
def _make_actor_kernel(use_mxu_small):
    """Build the fused MLP kernel.

    use_mxu_small=True  -> layers 1 & 3 on the MXU (v6e / v7x: VALU is the
                           binding slot after bf16 layer 2, MXU has slack).
    use_mxu_small=False -> layers 1 & 3 on the VPU/XLU (v5e: MXU is the
                           binding slot, don't add MXU work).
    """

    def actor_kernel(x_ref, w1_ref, b1_ref, w2_ref, b2_ref, w3_ref, b3_ref, o_ref):
        # x_ref : (K1, tb)   observations, batch on lanes (K1 = 8 or 3)
        # w1_ref: (H, K1)    torch layout (out, in), zero-padded cols if K1 = 8
        # b1_ref: (H, 1)     f32
        # w2_ref: (H, H)     torch layout (out, in) -> directly usable as W2 @ h1
        # b2_ref: (H, 1)     f32
        # w3_ref: (8, H) mxu path (rows 1..7 zero)  |  (H, 1) vpu path
        # b3_ref: (1, 1)     scalar bias in SMEM
        # o_ref : (OUT, tb)  lane-dense output
        x = x_ref[...]                                          # (K1, tb)

        # ---- Layer 1 -------------------------------------------------------
        if use_mxu_small:
            h1 = jnp.dot(w1_ref[...], x.astype(w1_ref.dtype),
                         preferred_element_type=jnp.float32)    # (H, tb)
        else:
            w1 = w1_ref[...]                                    # (H, 3) f32
            h1 = (w1[:, 0:1] * x[0:1, :]
                  + w1[:, 1:2] * x[1:2, :]
                  + w1[:, 2:3] * x[2:3, :])                     # (H, tb)
        h1 = jnp.maximum(h1 + b1_ref[...], 0.0)

        # ---- Layer 2: the well-shaped GEMM, MXU, f32 accumulation ----------
        h2 = jnp.dot(w2_ref[...], h1.astype(w2_ref.dtype),
                     preferred_element_type=jnp.float32)        # (H, tb)
        h2 = jnp.maximum(h2 + b2_ref[...], 0.0)

        # ---- Layer 3 -------------------------------------------------------
        if use_mxu_small:
            # W3 zero-padded to (8, H) so the MXU output tile is sublane-aligned;
            # row 0 holds the real result.
            y8 = jnp.dot(w3_ref[...], h2.astype(w3_ref.dtype),
                         preferred_element_type=jnp.float32)    # (8, tb)
            y = y8[0:1, :]                                      # (1, tb)
        else:
            y = jnp.sum(w3_ref[...] * h2, axis=0, keepdims=True)  # (1, tb)

        y = jnp.tanh(y + b3_ref[0, 0])
        o_ref[...] = (2.0 * y).astype(o_ref.dtype)

    return actor_kernel


# ----------------------------------------------------------------------------
# Host-side wrapper
# ----------------------------------------------------------------------------
def _round_up(v, m):
    return ((v + m - 1) // m) * m


def _device_kind():
    try:
        return jax.devices()[0].device_kind.lower()
    except Exception:
        return ""


def _pick_tb(batch, two_cores):
    """Batch tile: big enough to amortize the ~0.35us/step pipeline tax, small
    enough not to over-pad tiny batches; on 2-TC chips aim for grid >= 2."""
    parts = 2 if two_cores else 1
    per_part = -(-batch // parts)                    # cdiv
    tb = _round_up(max(per_part, 1), 128)
    return int(min(2048, max(128, tb)))


def actor_forward(x, params, *, tb=None, matmul_dtype=None, use_mxu_small_layers=None):
    """x: (B, 3) float32.  params: torch-layout weights.  Returns (B, 1) float32.

    tb:                 batch tile (auto: derived from B and chip; always a
                        multiple of 128).
    matmul_dtype:       MXU operand dtype (auto: bfloat16 on all generations,
                        f32 accumulation is kept via preferred_element_type).
    use_mxu_small_layers: run layers 1 & 3 on the MXU (auto: True except v5e).
    """
    B = x.shape[0]
    assert x.shape[1] == IN

    kind = _device_kind()
    is_v5e = ("v5 lite" in kind) or ("v5e" in kind) or ("v5litepod" in kind)
    is_v7 = ("v7" in kind) or ("7x" in kind)

    if matmul_dtype is None:
        matmul_dtype = jnp.bfloat16          # MXU-native on v5e/v6e/v7x
    if use_mxu_small_layers is None:
        use_mxu_small_layers = not is_v5e    # v5e: MXU already the binding slot
    if tb is None:
        tb = _pick_tb(B, two_cores=is_v7)
    else:
        tb = max(128, _round_up(tb, 128))

    grid = pl.cdiv(B, tb)
    b_pad = grid * tb

    k1 = IN_PAD if use_mxu_small_layers else IN

    # Transpose to (features, batch); zero-pad batch to a tile multiple and
    # (MXU path) features to a sublane tile.
    x_t = jnp.pad(x.T.astype(jnp.float32), ((0, k1 - IN), (0, b_pad - B)))

    b1 = params["b1"].reshape(H, 1).astype(jnp.float32)
    w2 = params["W2"].astype(matmul_dtype)                       # (H, H) MXU operand
    b2 = params["b2"].reshape(H, 1).astype(jnp.float32)
    b3 = params["b3"].reshape(1, 1).astype(jnp.float32)

    if use_mxu_small_layers:
        w1 = jnp.pad(params["W1"], ((0, 0), (0, IN_PAD - IN))).astype(matmul_dtype)  # (H, 8)
        w3 = jnp.pad(params["W3"], ((0, 8 - OUT), (0, 0))).astype(matmul_dtype)      # (8, H)
        w3_spec_shape = (8, H)
    else:
        w1 = params["W1"].astype(jnp.float32)                    # (H, 3)
        w3 = params["W3"].T.astype(jnp.float32)                  # (H, 1)
        w3_spec_shape = (H, 1)

    full = lambda shape: pl.BlockSpec(shape, lambda i: (0, 0))

    y_t = pl.pallas_call(
        _make_actor_kernel(use_mxu_small_layers),
        out_shape=jax.ShapeDtypeStruct((OUT, b_pad), jnp.float32),
        grid_spec=pltpu.PrefetchScalarGridSpec(
            num_scalar_prefetch=0,
            grid=(grid,),
            in_specs=[
                pl.BlockSpec((k1, tb), lambda i: (0, i)),        # x tile, batch on lanes
                full((H, k1)),                                   # w1 (resident)
                full((H, 1)),                                    # b1
                full((H, H)),                                    # w2
                full((H, 1)),                                    # b2
                full(w3_spec_shape),                             # w3
                pl.BlockSpec(memory_space=pltpu.MemorySpace.SMEM),  # b3 scalar
            ],
            out_specs=pl.BlockSpec((OUT, tb), lambda i: (0, i)),
        ),
        compiler_params=pltpu.CompilerParams(
            dimension_semantics=("parallel",),
        ),
    )(x_t, w1, b1, w2, b2, w3, b3)

    return y_t[:, :B].T                                          # (B, 1)


# ----------------------------------------------------------------------------
# Params / reference
# ----------------------------------------------------------------------------
def init_params(key):
    """Torch-layout params, torch.nn.Linear default init (uniform +/- 1/sqrt(fan_in))."""
    ks = jax.random.split(key, 6)

    def linear(kw, kb, fan_in, fan_out):
        bound = 1.0 / jnp.sqrt(float(fan_in))
        w = jax.random.uniform(kw, (fan_out, fan_in), jnp.float32, -bound, bound)
        b = jax.random.uniform(kb, (fan_out,), jnp.float32, -bound, bound)
        return w, b

    w1, b1 = linear(ks[0], ks[1], IN, H)
    w2, b2 = linear(ks[2], ks[3], H, H)
    w3, b3 = linear(ks[4], ks[5], H, OUT)
    return {"W1": w1, "b1": b1, "W2": w2, "b2": b2, "W3": w3, "b3": b3}


def actor_reference(x, params):
    """Pure-JAX reference of the torch forward pass (for correctness check)."""
    h1 = jnp.maximum(x @ params["W1"].T + params["b1"], 0.0)
    h2 = jnp.maximum(h1 @ params["W2"].T + params["b2"], 0.0)
    return 2.0 * jnp.tanh(h2 @ params["W3"].T + params["b3"])


if __name__ == "__main__":
    key = jax.random.PRNGKey(0)
    k_param, k_x = jax.random.split(key)

    params = init_params(k_param)
    B = 8
    x = jax.random.normal(k_x, (B, IN), jnp.float32)

    ref = actor_reference(x, params)

    # 1) Default config: bf16 MXU operands, B-derived tile, device-appropriate
    #    small-layer dispatch.
    out = jax.block_until_ready(actor_forward(x, params))
    assert out.shape == (B, OUT)
    assert jnp.allclose(out, ref, atol=5e-2, rtol=5e-2), "Pallas default (bf16) mismatch"

    # 2) f32 operands, MXU small layers (v6e/v7x-style dispatch), tight tolerance.
    out_f32_mxu = jax.block_until_ready(
        actor_forward(x, params, matmul_dtype=jnp.float32, use_mxu_small_layers=True))
    assert jnp.allclose(out_f32_mxu, ref, atol=1e-4, rtol=1e-4), "Pallas f32/MXU mismatch"

    # 3) f32 operands, VPU small layers (v5e-style dispatch), tight tolerance.
    out_f32_vpu = jax.block_until_ready(
        actor_forward(x, params, matmul_dtype=jnp.float32, use_mxu_small_layers=False))
    assert jnp.allclose(out_f32_vpu, ref, atol=1e-4, rtol=1e-4), "Pallas f32/VPU mismatch"

    print("KERNEL_OK")
</pallas_src>

<mosaic_0001>
module attributes {stable_mosaic.version = 11 : i64} {
  func.func @actor_kernel(%arg0: i32, %arg1: memref<8x128xf32, #tpu.memory_space<vmem>>, %arg2: memref<256x8xbf16, #tpu.memory_space<vmem>>, %arg3: memref<256x1xf32, #tpu.memory_space<vmem>>, %arg4: memref<256x256xbf16, #tpu.memory_space<vmem>>, %arg5: memref<256x1xf32, #tpu.memory_space<vmem>>, %arg6: memref<8x256xbf16, #tpu.memory_space<vmem>>, %arg7: memref<1x1xf32, #tpu.memory_space<smem>>, %arg8: memref<1x128xf32, #tpu.memory_space<vmem>>) attributes {dimension_semantics = [#tpu.dimension_semantics<parallel>], iteration_bounds = array<i64: 1>, scalar_prefetch = 0 : i64, scratch_operands = 0 : i64, tpu.core_type = #tpu.core_type<tc>, window_params = [{transform_indices = @transform_0, window_bounds = array<i64: 8, 128>}, {pipeline_mode = #tpu.pipeline_mode<synchronous>, transform_indices = @transform_1, window_bounds = array<i64: 256, 8>}, {pipeline_mode = #tpu.pipeline_mode<synchronous>, transform_indices = @transform_2, window_bounds = array<i64: 256, 1>}, {pipeline_mode = #tpu.pipeline_mode<synchronous>, transform_indices = @transform_3, window_bounds = array<i64: 256, 256>}, {pipeline_mode = #tpu.pipeline_mode<synchronous>, transform_indices = @transform_4, window_bounds = array<i64: 256, 1>}, {pipeline_mode = #tpu.pipeline_mode<synchronous>, transform_indices = @transform_5, window_bounds = array<i64: 8, 256>}, {transform_indices = @transform_6, window_bounds = array<i64: 1, 1>}, {transform_indices = @transform_7, window_bounds = array<i64: 1, 128>}]} {
    %c0 = arith.constant 0 : index
    %c0_0 = arith.constant 0 : index
    %0 = vector.load %arg1[%c0, %c0_0] : memref<8x128xf32, #tpu.memory_space<vmem>>, vector<8x128xf32>
    %c0_1 = arith.constant 0 : index
    %c0_2 = arith.constant 0 : index
    %1 = vector.load %arg2[%c0_1, %c0_2] : memref<256x8xbf16, #tpu.memory_space<vmem>>, vector<256x8xbf16>
    %2 = arith.truncf %0 : vector<8x128xf32> to vector<8x128xbf16>
    %cst = arith.constant dense<0.000000e+00> : vector<256x128xf32>
    %3 = tpu.matmul %1, %2, %cst {dimension_numbers = #tpu.dot_dimension_numbers<[1], [0], [0], [1], [0, 0, 1, 1], [], []>} : vector<256x8xbf16>, vector<8x128xbf16>, vector<256x128xf32> -> vector<256x128xf32>
    %c0_3 = arith.constant 0 : index
    %c0_4 = arith.constant 0 : index
    %4 = vector.load %arg3[%c0_3, %c0_4] : memref<256x1xf32, #tpu.memory_space<vmem>>, vector<256x1xf32>
    %5 = vector.broadcast %4 : vector<256x1xf32> to vector<256x128xf32>
    %6 = arith.addf %3, %5 : vector<256x128xf32>
    %cst_5 = arith.constant 0.000000e+00 : f32
    %7 = vector.broadcast %cst_5 : f32 to vector<256x128xf32>
    %8 = arith.maximumf %6, %7 : vector<256x128xf32>
    %c0_6 = arith.constant 0 : index
    %c0_7 = arith.constant 0 : index
    %9 = vector.load %arg4[%c0_6, %c0_7] : memref<256x256xbf16, #tpu.memory_space<vmem>>, vector<256x256xbf16>
    %10 = arith.truncf %8 : vector<256x128xf32> to vector<256x128xbf16>
    %cst_8 = arith.constant dense<0.000000e+00> : vector<256x128xf32>
    %11 = tpu.matmul %9, %10, %cst_8 {dimension_numbers = #tpu.dot_dimension_numbers<[1], [0], [0], [1], [0, 0, 1, 1], [], []>} : vector<256x256xbf16>, vector<256x128xbf16>, vector<256x128xf32> -> vector<256x128xf32>
    %c0_9 = arith.constant 0 : index
    %c0_10 = arith.constant 0 : index
    %12 = vector.load %arg5[%c0_9, %c0_10] : memref<256x1xf32, #tpu.memory_space<vmem>>, vector<256x1xf32>
    %13 = vector.broadcast %12 : vector<256x1xf32> to vector<256x128xf32>
    %14 = arith.addf %11, %13 : vector<256x128xf32>
    %cst_11 = arith.constant 0.000000e+00 : f32
    %15 = vector.broadcast %cst_11 : f32 to vector<256x128xf32>
    %16 = arith.maximumf %14, %15 : vector<256x128xf32>
    %c0_12 = arith.constant 0 : index
    %c0_13 = arith.constant 0 : index
    %17 = vector.load %arg6[%c0_12, %c0_13] : memref<8x256xbf16, #tpu.memory_space<vmem>>, vector<8x256xbf16>
    %18 = arith.truncf %16 : vector<256x128xf32> to vector<256x128xbf16>
    %cst_14 = arith.constant dense<0.000000e+00> : vector<8x128xf32>
    %19 = tpu.matmul %17, %18, %cst_14 {dimension_numbers = #tpu.dot_dimension_numbers<[1], [0], [0], [1], [0, 0, 1, 1], [], []>} : vector<8x256xbf16>, vector<256x128xbf16>, vector<8x128xf32> -> vector<8x128xf32>
    %20 = vector.extract_strided_slice %19 {offsets = [0, 0], sizes = [1, 128], strides = [1, 1]} : vector<8x128xf32> to vector<1x128xf32>
    %c0_15 = arith.constant 0 : index
    %c0_16 = arith.constant 0 : index
    %21 = memref.load %arg7[%c0_15, %c0_16] : memref<1x1xf32, #tpu.memory_space<smem>>
    %22 = vector.broadcast %21 : f32 to vector<1x128xf32>
    %23 = arith.addf %20, %22 : vector<1x128xf32>
    %24 = math.tanh %23 : vector<1x128xf32>
    %cst_17 = arith.constant 2.000000e+00 : f32
    %25 = vector.broadcast %cst_17 : f32 to vector<1x128xf32>
    %26 = arith.mulf %25, %24 : vector<1x128xf32>
    %c0_18 = arith.constant 0 : index
    %c0_19 = arith.constant 0 : index
    %27 = vector.load %arg8[%c0_18, %c0_19] : memref<1x128xf32, #tpu.memory_space<vmem>>, vector<1x128xf32>
    tpu.vector_store %arg8[%c0_18, %c0_19], %26 {strides = array<i32>} : memref<1x128xf32, #tpu.memory_space<vmem>>, vector<1x128xf32>,
    return
  }
  func.func @transform_0(%arg0: i32) -> (i32, i32) {
    %c0_i32 = arith.constant 0 : i32
    %c0_i32_0 = arith.constant 0 : i32
    return %c0_i32, %arg0 : i32, i32
  }
  func.func @transform_1(%arg0: i32) -> (i32, i32) {
    %c0_i32 = arith.constant 0 : i32
    %c0_i32_0 = arith.constant 0 : i32
    %c0_i32_1 = arith.constant 0 : i32
    return %c0_i32, %c0_i32_0 : i32, i32
  }
  func.func @transform_2(%arg0: i32) -> (i32, i32) {
    %c0_i32 = arith.constant 0 : i32
    %c0_i32_0 = arith.constant 0 : i32
    %c0_i32_1 = arith.constant 0 : i32
    return %c0_i32, %c0_i32_0 : i32, i32
  }
  func.func @transform_3(%arg0: i32) -> (i32, i32) {
    %c0_i32 = arith.constant 0 : i32
    %c0_i32_0 = arith.constant 0 : i32
    %c0_i32_1 = arith.constant 0 : i32
    return %c0_i32, %c0_i32_0 : i32, i32
  }
  func.func @transform_4(%arg0: i32) -> (i32, i32) {
    %c0_i32 = arith.constant 0 : i32
    %c0_i32_0 = arith.constant 0 : i32
    %c0_i32_1 = arith.constant 0 : i32
    return %c0_i32, %c0_i32_0 : i32, i32
  }
  func.func @transform_5(%arg0: i32) -> (i32, i32) {
    %c0_i32 = arith.constant 0 : i32
    %c0_i32_0 = arith.constant 0 : i32
    %c0_i32_1 = arith.constant 0 : i32
    return %c0_i32, %c0_i32_0 : i32, i32
  }
  func.func @transform_6(%arg0: i32) -> (i32, i32) {
    %c0_i32 = arith.constant 0 : i32
    %c0_i32_0 = arith.constant 0 : i32
    %c0_i32_1 = arith.constant 0 : i32
    return %c0_i32, %c0_i32_0 : i32, i32
  }
  func.func @transform_7(%arg0: i32) -> (i32, i32) {
    %c0_i32 = arith.constant 0 : i32
    %c0_i32_0 = arith.constant 0 : i32
    return %c0_i32, %arg0 : i32, i32
  }
}

</mosaic_0001>

<llo_original>
// kernel: tpu_custom_call.1
$region0: #{tpu_custom_call.1}
  #allocation0 [shape = 'u32[]', space=smem, size = 0x4, offset = 0x4, fixed_abs, tag = 'smem constant byte address 0x4 - core index']
  #allocation1 [shape = 'u32[144,128]{1,0:T(1,128)}', space=vmem, size = 0x12000, scoped, tag = 'internal scratch']
  #allocation2 [shape = 'f32[1,1]{1,0:T(1,128)S(6)}', space=smem, size = 0x200, scoped, tag = 'scoped memory for tpu_custom_call.1']
  %s0 = inlined_call_operand.vmem [shape: f32[8,128], index: 0, kind: input, shape index: {}]
  %s1 = inlined_call_operand.vmem [shape: bf16[256,8], index: 1, kind: input, shape index: {}]
  %s2 = inlined_call_operand.vmem [shape: f32[256,1], index: 2, kind: input, shape index: {}]
  %s3 = inlined_call_operand.vmem [shape: bf16[256,256], index: 3, kind: input, shape index: {}]
  %s4 = inlined_call_operand.vmem [shape: f32[256,1], index: 4, kind: input, shape index: {}]
  %s5 = inlined_call_operand.vmem [shape: bf16[8,256], index: 5, kind: input, shape index: {}]
  %s6 = inlined_call_operand.<no memory space> [shape: f32[1,1], index: 6, kind: input, shape index: {}]
  %s7 = inlined_call_operand.hbm [shape: f32[1,128], index: 7, kind: output, shape index: {}]
  %s8 = sld [smem:[#allocation0]]
  $region38: #{tpu_custom_call.1} parent=0
    _
  %s10 = ssub.s32 1, %s8
  %s11 = scalar_select 0, %s10, %s8
  %12 = sst [smem:[#allocation2]] %s6
  $region1: #{tpu_custom_call.1} parent=0
    #allocation3 [shape = 'u8[512]{0}', space=vmem, size = 0x400, scoped, tag = 'output window, operand 0, single buffered']
    #allocation4 [shape = 's32[1]{0}', space=sflag, size = 0x4, scoped, tag = 'scoped memory for tpu_custom_call.1']
    %13 = vsyncpa [#allocation4], 0
    // Predicated region
    $region2: #{tpu_custom_call.1} parent=1 // pred_check
      _
    $region3: #{tpu_custom_call.1} parent=1 // pred_check_branch
      %15 = sbr.rel (0) target = $region5
    $region4: #{tpu_custom_call.1} parent=1 // pred_region
      _
    $region5: #{tpu_custom_call.1} parent=1 // pred_fallthru
      _
    // Predicated region
    $region6: #{tpu_custom_call.1} parent=1 // pred_check
      _
    $region7: #{tpu_custom_call.1} parent=1 // pred_check_branch
      %17 = sbr.rel (0) target = $region9
    $region8: #{tpu_custom_call.1} parent=1 // pred_region
      _
    $region9: #{tpu_custom_call.1} parent=1 // pred_fallthru
      _
    // Predicated region
    $region10: #{tpu_custom_call.1} parent=1 // pred_check
      _
    $region11: #{tpu_custom_call.1} parent=1 // pred_check_branch
      %19 = sbr.rel (0) target = $region13
    $region12: #{tpu_custom_call.1} parent=1 // pred_region
      _
    $region13: #{tpu_custom_call.1} parent=1 // pred_fallthru
      _
    // Predicated region
    $region14: #{tpu_custom_call.1} parent=1 // pred_check
      _
    $region15: #{tpu_custom_call.1} parent=1 // pred_check_branch
      %21 = sbr.rel (0) target = $region17
    $region16: #{tpu_custom_call.1} parent=1 // pred_region
      _
    $region17: #{tpu_custom_call.1} parent=1 // pred_fallthru
      _
    // Predicated region
    $region18: #{tpu_custom_call.1} parent=1 // pred_check
      _
    $region19: #{tpu_custom_call.1} parent=1 // pred_check_branch
      %23 = sbr.rel (0) target = $region21
    $region20: #{tpu_custom_call.1} parent=1 // pred_region
      _
    $region21: #{tpu_custom_call.1} parent=1 // pred_fallthru
      _
    // Predicated region
    $region22: #{tpu_custom_call.1} parent=1 // pred_check
      _
    $region23: #{tpu_custom_call.1} parent=1 // pred_check_branch
      %25 = sbr.rel (0) target = $region25
    $region24: #{tpu_custom_call.1} parent=1 // pred_region
      _
    $region25: #{tpu_custom_call.1} parent=1 // pred_fallthru
      _
    // Predicated region
    $region26: #{tpu_custom_call.1} parent=1 // pred_check
      _
    $region27: #{tpu_custom_call.1} parent=1 // pred_check_branch
      %27 = sbr.rel (0) target = $region29
    $region28: #{tpu_custom_call.1} parent=1 // pred_region
      _
    $region29: #{tpu_custom_call.1} parent=1 // pred_fallthru
      _
    %v29 = vld [vmem:[%s0] sm:$0xff]
    %v30 = vld [vmem:[%s1] sm:$0xf]
    %v31 = vld [vmem:[%s1 + $0x4] sm:$0xf]
    %v32 = vld [vmem:[%s1 + $0x8] sm:$0xf]
    %v33 = vld [vmem:[%s1 + $0xc] sm:$0xf]
    %v34 = vld [vmem:[%s1 + $0x10] sm:$0xf]
    %v35 = vld [vmem:[%s1 + $0x14] sm:$0xf]
    %v36 = vld [vmem:[%s1 + $0x18] sm:$0xf]
    %v37 = vld [vmem:[%s1 + $0x1c] sm:$0xf]
    %v38 = vld [vmem:[%s1 + $0x20] sm:$0xf]
    %v39 = vld [vmem:[%s1 + $0x24] sm:$0xf]
    %v40 = vld [vmem:[%s1 + $0x28] sm:$0xf]
    %v41 = vld [vmem:[%s1 + $0x2c] sm:$0xf]
    %v42 = vld [vmem:[%s1 + $0x30] sm:$0xf]
    %v43 = vld [vmem:[%s1 + $0x34] sm:$0xf]
    %v44 = vld [vmem:[%s1 + $0x38] sm:$0xf]
    %v45 = vld [vmem:[%s1 + $0x3c] sm:$0xf]
    %v46 = vld [vmem:[%s1 + $0x40] sm:$0xf]
    %v47 = vld [vmem:[%s1 + $0x44] sm:$0xf]
    %v48 = vld [vmem:[%s1 + $0x48] sm:$0xf]
    %v49 = vld [vmem:[%s1 + $0x4c] sm:$0xf]
    %v50 = vld [vmem:[%s1 + $0x50] sm:$0xf]
    %v51 = vld [vmem:[%s1 + $0x54] sm:$0xf]
    %v52 = vld [vmem:[%s1 + $0x58] sm:$0xf]
    %v53 = vld [vmem:[%s1 + $0x5c] sm:$0xf]
    %v54 = vld [vmem:[%s1 + $0x60] sm:$0xf]
    %v55 = vld [vmem:[%s1 + $0x64] sm:$0xf]
    %v56 = vld [vmem:[%s1 + $0x68] sm:$0xf]
    %v57 = vld [vmem:[%s1 + $0x6c] sm:$0xf]
    %v58 = vld [vmem:[%s1 + $0x70] sm:$0xf]
    %v59 = vld [vmem:[%s1 + $0x74] sm:$0xf]
    %v60 = vld [vmem:[%s1 + $0x78] sm:$0xf]
    %v61 = vld [vmem:[%s1 + $0x7c] sm:$0xf]
    %v62 = vpack.c.bf16 %v29, %v29
    %v63 = vld [vmem:[%s2] sm:$0xff]
    %v64 = vld [vmem:[%s2 + $0x8] sm:$0xff]
    %v65 = vld [vmem:[%s2 + $0x10] sm:$0xff]
    %v66 = vld [vmem:[%s2 + $0x18] sm:$0xff]
    %v67 = vld [vmem:[%s2 + $0x20] sm:$0xff]
    %v68 = vld [vmem:[%s2 + $0x28] sm:$0xff]
    %v69 = vld [vmem:[%s2 + $0x30] sm:$0xff]
    %v70 = vld [vmem:[%s2 + $0x38] sm:$0xff]
    %v71 = vld [vmem:[%s2 + $0x40] sm:$0xff]
    %v72 = vld [vmem:[%s2 + $0x48] sm:$0xff]
    %v73 = vld [vmem:[%s2 + $0x50] sm:$0xff]
    %v74 = vld [vmem:[%s2 + $0x58] sm:$0xff]
    %v75 = vld [vmem:[%s2 + $0x60] sm:$0xff]
    %v76 = vld [vmem:[%s2 + $0x68] sm:$0xff]
    %v77 = vld [vmem:[%s2 + $0x70] sm:$0xff]
    %v78 = vld [vmem:[%s2 + $0x78] sm:$0xff]
    %v79 = vld [vmem:[%s2 + $0x80] sm:$0xff]
    %v80 = vld [vmem:[%s2 + $0x88] sm:$0xff]
    %v81 = vld [vmem:[%s2 + $0x90] sm:$0xff]
    %v82 = vld [vmem:[%s2 + $0x98] sm:$0xff]
    %v83 = vld [vmem:[%s2 + $0xa0] sm:$0xff]
    %v84 = vld [vmem:[%s2 + $0xa8] sm:$0xff]
    %v85 = vld [vmem:[%s2 + $0xb0] sm:$0xff]
    %v86 = vld [vmem:[%s2 + $0xb8] sm:$0xff]
    %v87 = vld [vmem:[%s2 + $0xc0] sm:$0xff]
    %v88 = vld [vmem:[%s2 + $0xc8] sm:$0xff]
    %v89 = vld [vmem:[%s2 + $0xd0] sm:$0xff]
    %v90 = vld [vmem:[%s2 + $0xd8] sm:$0xff]
    %v91 = vld [vmem:[%s2 + $0xe0] sm:$0xff]
    %v92 = vld [vmem:[%s2 + $0xe8] sm:$0xff]
    %v93 = vld [vmem:[%s2 + $0xf0] sm:$0xff]
    %v94 = vld [vmem:[%s2 + $0xf8] sm:$0xff]
    %96 = vset.pattern.permute.xlu0 0
    %97 = vperm.xlu0 %96, %v63
    %v98 = vpop.permute.xlu0 %97
    %101 = vset.pattern.permute.xlu0 0
    %102 = vperm.xlu0 %101, %v64
    %v103 = vpop.permute.xlu0 %102
    %106 = vset.pattern.permute.xlu0 0
    %107 = vperm.xlu0 %106, %v65
    %v108 = vpop.permute.xlu0 %107
    %111 = vset.pattern.permute.xlu0 0
    %112 = vperm.xlu0 %111, %v66
    %v113 = vpop.permute.xlu0 %112
    %116 = vset.pattern.permute.xlu0 0
    %117 = vperm.xlu0 %116, %v67
    %v118 = vpop.permute.xlu0 %117
    %121 = vset.pattern.permute.xlu0 0
    %122 = vperm.xlu0 %121, %v68
    %v123 = vpop.permute.xlu0 %122
    %126 = vset.pattern.permute.xlu0 0
    %127 = vperm.xlu0 %126, %v69
    %v128 = vpop.permute.xlu0 %127
    %131 = vset.pattern.permute.xlu0 0
    %132 = vperm.xlu0 %131, %v70
    %v133 = vpop.permute.xlu0 %132
    %136 = vset.pattern.permute.xlu0 0
    %137 = vperm.xlu0 %136, %v71
    %v138 = vpop.permute.xlu0 %137
    %141 = vset.pattern.permute.xlu0 0
    %142 = vperm.xlu0 %141, %v72
    %v143 = vpop.permute.xlu0 %142
    %146 = vset.pattern.permute.xlu0 0
    %147 = vperm.xlu0 %146, %v73
    %v148 = vpop.permute.xlu0 %147
    %151 = vset.pattern.permute.xlu0 0
    %152 = vperm.xlu0 %151, %v74
    %v153 = vpop.permute.xlu0 %152
    %156 = vset.pattern.permute.xlu0 0
    %157 = vperm.xlu0 %156, %v75
    %v158 = vpop.permute.xlu0 %157
    %161 = vset.pattern.permute.xlu0 0
    %162 = vperm.xlu0 %161, %v76
    %v163 = vpop.permute.xlu0 %162
    %166 = vset.pattern.permute.xlu0 0
    %167 = vperm.xlu0 %166, %v77
    %v168 = vpop.permute.xlu0 %167
    %171 = vset.pattern.permute.xlu0 0
    %172 = vperm.xlu0 %171, %v78
    %v173 = vpop.permute.xlu0 %172
    %176 = vset.pattern.permute.xlu0 0
    %177 = vperm.xlu0 %176, %v79
    %v178 = vpop.permute.xlu0 %177
    %181 = vset.pattern.permute.xlu0 0
    %182 = vperm.xlu0 %181, %v80
    %v183 = vpop.permute.xlu0 %182
    %186 = vset.pattern.permute.xlu0 0
    %187 = vperm.xlu0 %186, %v81
    %v188 = vpop.permute.xlu0 %187
    %191 = vset.pattern.permute.xlu0 0
    %192 = vperm.xlu0 %191, %v82
    %v193 = vpop.permute.xlu0 %192
    %196 = vset.pattern.permute.xlu0 0
    %197 = vperm.xlu0 %196, %v83
    %v198 = vpop.permute.xlu0 %197
    %201 = vset.pattern.permute.xlu0 0
    %202 = vperm.xlu0 %201, %v84
    %v203 = vpop.permute.xlu0 %202
    %206 = vset.pattern.permute.xlu0 0
    %207 = vperm.xlu0 %206, %v85
    %v208 = vpop.permute.xlu0 %207
    %211 = vset.pattern.permute.xlu0 0
    %212 = vperm.xlu0 %211, %v86
    %v213 = vpop.permute.xlu0 %212
    %216 = vset.pattern.permute.xlu0 0
    %217 = vperm.xlu0 %216, %v87
    %v218 = vpop.permute.xlu0 %217
    %221 = vset.pattern.permute.xlu0 0
    %222 = vperm.xlu0 %221, %v88
    %v223 = vpop.permute.xlu0 %222
    %226 = vset.pattern.permute.xlu0 0
    %227 = vperm.xlu0 %226, %v89
    %v228 = vpop.permute.xlu0 %227
    %231 = vset.pattern.permute.xlu0 0
    %232 = vperm.xlu0 %231, %v90
    %v233 = vpop.permute.xlu0 %232
    %236 = vset.pattern.permute.xlu0 0
    %237 = vperm.xlu0 %236, %v91
    %v238 = vpop.permute.xlu0 %237
    %241 = vset.pattern.permute.xlu0 0
    %242 = vperm.xlu0 %241, %v92
    %v243 = vpop.permute.xlu0 %242
    %246 = vset.pattern.permute.xlu0 0
    %247 = vperm.xlu0 %246, %v93
    %v248 = vpop.permute.xlu0 %247
    %251 = vset.pattern.permute.xlu0 0
    %252 = vperm.xlu0 %251, %v94
    %v253 = vpop.permute.xlu0 %252
    %v287 = vunpack.c.l.b16 %v30
    %v288 = vunpack.c.l.b16 %v31
    %v289 = vunpack.c.l.b16 %v32
    %v290 = vunpack.c.l.b16 %v33
    %v291 = vunpack.c.l.b16 %v34
    %v292 = vunpack.c.l.b16 %v35
    %v293 = vunpack.c.l.b16 %v36
    %v294 = vunpack.c.l.b16 %v37
    %v295 = vunpack.c.l.b16 %v38
    %v296 = vunpack.c.l.b16 %v39
    %v297 = vunpack.c.l.b16 %v40
    %v298 = vunpack.c.l.b16 %v41
    %v299 = vunpack.c.l.b16 %v42
    %v300 = vunpack.c.l.b16 %v43
    %v301 = vunpack.c.l.b16 %v44
    %v302 = vunpack.c.l.b16 %v45
    %v303 = vunpack.c.l.b16 %v46
    %v304 = vunpack.c.l.b16 %v47
    %v305 = vunpack.c.l.b16 %v48
    %v306 = vunpack.c.l.b16 %v49
    %v307 = vunpack.c.l.b16 %v50
    %v308 = vunpack.c.l.b16 %v51
    %v309 = vunpack.c.l.b16 %v52
    %v310 = vunpack.c.l.b16 %v53
    %v311 = vunpack.c.l.b16 %v54
    %v312 = vunpack.c.l.b16 %v55
    %v313 = vunpack.c.l.b16 %v56
    %v314 = vunpack.c.l.b16 %v57
    %v315 = vunpack.c.l.b16 %v58
    %v316 = vunpack.c.l.b16 %v59
    %v317 = vunpack.c.l.b16 %v60
    %v318 = vunpack.c.l.b16 %v61
    %v319 = vpack.c.b16 %v288, %v287
    %v320 = vpack.c.b16 %v290, %v289
    %v321 = vpack.c.b16 %v292, %v291
    %v322 = vpack.c.b16 %v294, %v293
    %v323 = vpack.c.b16 %v296, %v295
    %v324 = vpack.c.b16 %v298, %v297
    %v325 = vpack.c.b16 %v300, %v299
    %v326 = vpack.c.b16 %v302, %v301
    %v327 = vpack.c.b16 %v304, %v303
    %v328 = vpack.c.b16 %v306, %v305
    %v329 = vpack.c.b16 %v308, %v307
    %v330 = vpack.c.b16 %v310, %v309
    %v331 = vpack.c.b16 %v312, %v311
    %v332 = vpack.c.b16 %v314, %v313
    %v333 = vpack.c.b16 %v316, %v315
    %v334 = vpack.c.b16 %v318, %v317
    %vm335 = vcmask 64512
    %v337 = vsel %vm335, %v319, 0
    %v340 = vsel %vm335, %v320, 0
    %v343 = vsel %vm335, %v321, 0
    %v346 = vsel %vm335, %v322, 0
    %v349 = vsel %vm335, %v323, 0
    %v352 = vsel %vm335, %v324, 0
    %v355 = vsel %vm335, %v325, 0
    %v358 = vsel %vm335, %v326, 0
    %v361 = vsel %vm335, %v327, 0
    %v364 = vsel %vm335, %v328, 0
    %v367 = vsel %vm335, %v329, 0
    %v370 = vsel %vm335, %v330, 0
    %v373 = vsel %vm335, %v331, 0
    %v376 = vsel %vm335, %v332, 0
    %v379 = vsel %vm335, %v333, 0
    %v382 = vsel %vm335, %v334, 0
    %vm384 = vcmask 1043456
    %v386 = vsel %vm384, %v62, 0
    %388 = vmatprep.subr.bf16.mxu0 0
    %389 = vmatpush1.bf16.msra.mxu0 %v386
    %390 = vmatprep.subr.bf16.mxu0 0
    %391 = vmatpush1.bf16.msra.mxu0 0
    %392 = vmatprep.subr.bf16.mxu0 0
    %393 = vmatpush1.bf16.msra.mxu0 0
    %394 = vmatprep.subr.bf16.mxu0 0
    %395 = vmatpush1.bf16.msra.mxu0 0
    %396 = vmatprep.subr.bf16.mxu0 0
    %397 = vmatpush1.bf16.msra.mxu0 0
    %398 = vmatprep.subr.bf16.mxu0 0
    %399 = vmatpush1.bf16.msra.mxu0 0
    %400 = vmatprep.subr.bf16.mxu0 0
    %401 = vmatpush1.bf16.msra.mxu0 0
    %402 = vmatprep.subr.bf16.mxu0 0
    %403 = vmatpush1.bf16.msra.mxu0 0
    %404 = vmatprep.subr.bf16.mxu0 0
    %405 = vmatpush1.bf16.msra.mxu0 0
    %406 = vmatprep.subr.bf16.mxu0 0
    %407 = vmatpush1.bf16.msra.mxu0 0
    %408 = vmatprep.subr.bf16.mxu0 0
    %409 = vmatpush1.bf16.msra.mxu0 0
    %410 = vmatprep.subr.bf16.mxu0 0
    %411 = vmatpush1.bf16.msra.mxu0 0
    %412 = vmatprep.subr.bf16.mxu0 0
    %413 = vmatpush1.bf16.msra.mxu0 0
    %414 = vmatprep.subr.bf16.mxu0 0
    %415 = vmatpush1.bf16.msra.mxu0 0
    %416 = vmatprep.subr.bf16.mxu0 0
    %417 = vmatpush1.bf16.msra.mxu0 0
    %418 = vmatprep.subr.bf16.mxu0 0
    %419 = vmatpush1.bf16.msra.mxu0 0
    %420 = vmatprep.mubr.bf16.mxu0 0
    %421 = vmatmul.mubr.bf16.gmra.mrb[0].mxu0 %v337
    %v422 = vpop.f32.mrb[0].mxu0
    %v423 = vadd.f32 %v98, %v422
    %v424 = vpop.f32.mrb[0].mxu0
    %v425 = vpop.f32.mrb[0].mxu0
    %v426 = vadd.f32 %v103, %v425
    %v427 = vpop.f32.mrb[0].mxu0
    %428 = vmatprep.mubr.bf16.mxu0 0
    %429 = vmatmul.mubr.bf16.gmra.mrb[0].mxu0 %v340
    %v430 = vpop.f32.mrb[0].mxu0
    %v431 = vadd.f32 %v108, %v430
    %v432 = vpop.f32.mrb[0].mxu0
    %v433 = vpop.f32.mrb[0].mxu0
    %v434 = vadd.f32 %v113, %v433
    %v435 = vpop.f32.mrb[0].mxu0
    %436 = vmatprep.mubr.bf16.mxu0 0
    %437 = vmatmul.mubr.bf16.gmra.mrb[0].mxu0 %v343
    %v438 = vpop.f32.mrb[0].mxu0
    %v439 = vadd.f32 %v118, %v438
    %v440 = vpop.f32.mrb[0].mxu0
    %v441 = vpop.f32.mrb[0].mxu0
    %v442 = vadd.f32 %v123, %v441
    %v443 = vpop.f32.mrb[0].mxu0
    %444 = vmatprep.mubr.bf16.mxu0 0
    %445 = vmatmul.mubr.bf16.gmra.mrb[0].mxu0 %v346
    %v446 = vpop.f32.mrb[0].mxu0
    %v447 = vadd.f32 %v128, %v446
    %v448 = vpop.f32.mrb[0].mxu0
    %v449 = vpop.f32.mrb[0].mxu0
    %v450 = vadd.f32 %v133, %v449
    %v451 = vpop.f32.mrb[0].mxu0
    %452 = vmatprep.mubr.bf16.mxu0 0
    %453 = vmatmul.mubr.bf16.gmra.mrb[0].mxu0 %v349
    %v454 = vpop.f32.mrb[0].mxu0
    %v455 = vadd.f32 %v138, %v454
    %v456 = vpop.f32.mrb[0].mxu0
    %v457 = vpop.f32.mrb[0].mxu0
    %v458 = vadd.f32 %v143, %v457
    %v459 = vpop.f32.mrb[0].mxu0
    %460 = vmatprep.mubr.bf16.mxu0 0
    %461 = vmatmul.mubr.bf16.gmra.mrb[0].mxu0 %v352
    %v462 = vpop.f32.mrb[0].mxu0
    %v463 = vadd.f32 %v148, %v462
    %v464 = vpop.f32.mrb[0].mxu0
    %v465 = vpop.f32.mrb[0].mxu0
    %v466 = vadd.f32 %v153, %v465
    %v467 = vpop.f32.mrb[0].mxu0
    %468 = vmatprep.mubr.bf16.mxu0 0
    %469 = vmatmul.mubr.bf16.gmra.mrb[0].mxu0 %v355
    %v470 = vpop.f32.mrb[0].mxu0
    %v471 = vadd.f32 %v158, %v470
    %v472 = vpop.f32.mrb[0].mxu0
    %v473 = vpop.f32.mrb[0].mxu0
    %v474 = vadd.f32 %v163, %v473
    %v475 = vpop.f32.mrb[0].mxu0
    %476 = vmatprep.mubr.bf16.mxu0 0
    %477 = vmatmul.mubr.bf16.gmra.mrb[0].mxu0 %v358
    %v478 = vpop.f32.mrb[0].mxu0
    %v479 = vadd.f32 %v168, %v478
    %v480 = vpop.f32.mrb[0].mxu0
    %v481 = vpop.f32.mrb[0].mxu0
    %v482 = vadd.f32 %v173, %v481
    %v483 = vpop.f32.mrb[0].mxu0
    %484 = vmatprep.mubr.bf16.mxu0 0
    %485 = vmatmul.mubr.bf16.gmra.mrb[0].mxu0 %v361
    %v486 = vpop.f32.mrb[0].mxu0
    %v487 = vadd.f32 %v178, %v486
    %v488 = vpop.f32.mrb[0].mxu0
    %v489 = vpop.f32.mrb[0].mxu0
    %v490 = vadd.f32 %v183, %v489
    %v491 = vpop.f32.mrb[0].mxu0
    %492 = vmatprep.mubr.bf16.mxu0 0
    %493 = vmatmul.mubr.bf16.gmra.mrb[0].mxu0 %v364
    %v494 = vpop.f32.mrb[0].mxu0
    %v495 = vadd.f32 %v188, %v494
    %v496 = vpop.f32.mrb[0].mxu0
    %v497 = vpop.f32.mrb[0].mxu0
    %v498 = vadd.f32 %v193, %v497
    %v499 = vpop.f32.mrb[0].mxu0
    %500 = vmatprep.mubr.bf16.mxu0 0
    %501 = vmatmul.mubr.bf16.gmra.mrb[0].mxu0 %v367
    %v502 = vpop.f32.mrb[0].mxu0
    %v503 = vadd.f32 %v198, %v502
    %v504 = vpop.f32.mrb[0].mxu0
    %v505 = vpop.f32.mrb[0].mxu0
    %v506 = vadd.f32 %v203, %v505
    %v507 = vpop.f32.mrb[0].mxu0
    %508 = vmatprep.mubr.bf16.mxu0 0
    %509 = vmatmul.mubr.bf16.gmra.mrb[0].mxu0 %v370
    %v510 = vpop.f32.mrb[0].mxu0
    %v511 = vadd.f32 %v208, %v510
    %v512 = vpop.f32.mrb[0].mxu0
    %v513 = vpop.f32.mrb[0].mxu0
    %v514 = vadd.f32 %v213, %v513
    %v515 = vpop.f32.mrb[0].mxu0
    %516 = vmatprep.mubr.bf16.mxu0 0
    %517 = vmatmul.mubr.bf16.gmra.mrb[0].mxu0 %v373
    %v518 = vpop.f32.mrb[0].mxu0
    %v519 = vadd.f32 %v218, %v518
    %v520 = vpop.f32.mrb[0].mxu0
    %v521 = vpop.f32.mrb[0].mxu0
    %v522 = vadd.f32 %v223, %v521
    %v523 = vpop.f32.mrb[0].mxu0
    %524 = vmatprep.mubr.bf16.mxu0 0
    %525 = vmatmul.mubr.bf16.gmra.mrb[0].mxu0 %v376
    %v526 = vpop.f32.mrb[0].mxu0
    %v527 = vadd.f32 %v228, %v526
    %v528 = vpop.f32.mrb[0].mxu0
    %v529 = vpop.f32.mrb[0].mxu0
    %v530 = vadd.f32 %v233, %v529
    %v531 = vpop.f32.mrb[0].mxu0
    %532 = vmatprep.mubr.bf16.mxu0 0
    %533 = vmatmul.mubr.bf16.gmra.mrb[0].mxu0 %v379
    %v534 = vpop.f32.mrb[0].mxu0
    %v535 = vadd.f32 %v238, %v534
    %v536 = vpop.f32.mrb[0].mxu0
    %v537 = vpop.f32.mrb[0].mxu0
    %v538 = vadd.f32 %v243, %v537
    %v539 = vpop.f32.mrb[0].mxu0
    %540 = vmatprep.mubr.bf16.mxu0 0
    %541 = vmatmul.mubr.bf16.gmra.mrb[0].mxu0 %v382
    %v542 = vpop.f32.mrb[0].mxu0
    %v543 = vadd.f32 %v248, %v542
    %v544 = vpop.f32.mrb[0].mxu0
    %v545 = vpop.f32.mrb[0].mxu0
    %v546 = vadd.f32 %v253, %v545
    %v547 = vpop.f32.mrb[0].mxu0
    %548 = vdwg.mxu0
    %v549 = vmax.f32 %v423, 0.0
    %v550 = vmax.f32 %v426, 0.0
    %v551 = vmax.f32 %v431, 0.0
    %v552 = vmax.f32 %v434, 0.0
    %v553 = vmax.f32 %v439, 0.0
    %v554 = vmax.f32 %v442, 0.0
    %v555 = vmax.f32 %v447, 0.0
    %v556 = vmax.f32 %v450, 0.0
    %v557 = vmax.f32 %v455, 0.0
    %v558 = vmax.f32 %v458, 0.0
    %v559 = vmax.f32 %v463, 0.0
    %v560 = vmax.f32 %v466, 0.0
    %v561 = vmax.f32 %v471, 0.0
    %v562 = vmax.f32 %v474, 0.0
    %v563 = vmax.f32 %v479, 0.0
    %v564 = vmax.f32 %v482, 0.0
    %v565 = vmax.f32 %v487, 0.0
    %v566 = vmax.f32 %v490, 0.0
    %v567 = vmax.f32 %v495, 0.0
    %v568 = vmax.f32 %v498, 0.0
    %v569 = vmax.f32 %v503, 0.0
    %v570 = vmax.f32 %v506, 0.0
    %v571 = vmax.f32 %v511, 0.0
    %v572 = vmax.f32 %v514, 0.0
    %v573 = vmax.f32 %v519, 0.0
    %v574 = vmax.f32 %v522, 0.0
    %v575 = vmax.f32 %v527, 0.0
    %v576 = vmax.f32 %v530, 0.0
    %v577 = vmax.f32 %v535, 0.0
    %v578 = vmax.f32 %v538, 0.0
    %v579 = vmax.f32 %v543, 0.0
    %v580 = vmax.f32 %v546, 0.0
    %v581 = vld [vmem:[%s3] sm:$0xff]
    %v582 = vld [vmem:[%s3 + $0x8] sm:$0xff]
    %v583 = vld [vmem:[%s3 + $0x10] sm:$0xff]
    %v584 = vld [vmem:[%s3 + $0x18] sm:$0xff]
    %v585 = vld [vmem:[%s3 + $0x20] sm:$0xff]
    %v586 = vld [vmem:[%s3 + $0x28] sm:$0xff]
    %v587 = vld [vmem:[%s3 + $0x30] sm:$0xff]
    %v588 = vld [vmem:[%s3 + $0x38] sm:$0xff]
    %v589 = vld [vmem:[%s3 + $0x40] sm:$0xff]
    %v590 = vld [vmem:[%s3 + $0x48] sm:$0xff]
    %v591 = vld [vmem:[%s3 + $0x50] sm:$0xff]
    %v592 = vld [vmem:[%s3 + $0x58] sm:$0xff]
    %v593 = vld [vmem:[%s3 + $0x60] sm:$0xff]
    %v594 = vld [vmem:[%s3 + $0x68] sm:$0xff]
    %v595 = vld [vmem:[%s3 + $0x70] sm:$0xff]
    %v596 = vld [vmem:[%s3 + $0x78] sm:$0xff]
    %v597 = vld [vmem:[%s3 + $0x80] sm:$0xff]
    %v598 = vld [vmem:[%s3 + $0x88] sm:$0xff]
    %v599 = vld [vmem:[%s3 + $0x90] sm:$0xff]
    %v600 = vld [vmem:[%s3 + $0x98] sm:$0xff]
    %v601 = vld [vmem:[%s3 + $0xa0] sm:$0xff]
    %v602 = vld [vmem:[%s3 + $0xa8] sm:$0xff]
    %v603 = vld [vmem:[%s3 + $0xb0] sm:$0xff]
    %v604 = vld [vmem:[%s3 + $0xb8] sm:$0xff]
    %v605 = vld [vmem:[%s3 + $0xc0] sm:$0xff]
    %v606 = vld [vmem:[%s3 + $0xc8] sm:$0xff]
    %v607 = vld [vmem:[%s3 + $0xd0] sm:$0xff]
    %v608 = vld [vmem:[%s3 + $0xd8] sm:$0xff]
    %v609 = vld [vmem:[%s3 + $0xe0] sm:$0xff]
    %v610 = vld [vmem:[%s3 + $0xe8] sm:$0xff]
    %v611 = vld [vmem:[%s3 + $0xf0] sm:$0xff]
    %v612 = vld [vmem:[%s3 + $0xf8] sm:$0xff]
    %v613 = vpack.c.bf16 %v550, %v549
    %v614 = vpack.c.bf16 %v552, %v551
    %v615 = vpack.c.bf16 %v554, %v553
    %v616 = vpack.c.bf16 %v556, %v555
    %v617 = vpack.c.bf16 %v558, %v557
    %v618 = vpack.c.bf16 %v560, %v559
    %v619 = vpack.c.bf16 %v562, %v561
    %v620 = vpack.c.bf16 %v564, %v563
    %v621 = vpack.c.bf16 %v566, %v565
    %v622 = vpack.c.bf16 %v568, %v567
    %v623 = vpack.c.bf16 %v570, %v569
    %v624 = vpack.c.bf16 %v572, %v571
    %v625 = vpack.c.bf16 %v574, %v573
    %v626 = vpack.c.bf16 %v576, %v575
    %v627 = vpack.c.bf16 %v578, %v577
    %v628 = vpack.c.bf16 %v580, %v579
    %v629 = vld [vmem:[%s4] sm:$0xff]
    %v630 = vld [vmem:[%s4 + $0x8] sm:$0xff]
    %v631 = vld [vmem:[%s4 + $0x10] sm:$0xff]
    %v632 = vld [vmem:[%s4 + $0x18] sm:$0xff]
    %v633 = vld [vmem:[%s4 + $0x20] sm:$0xff]
    %v634 = vld [vmem:[%s4 + $0x28] sm:$0xff]
    %v635 = vld [vmem:[%s4 + $0x30] sm:$0xff]
    %v636 = vld [vmem:[%s4 + $0x38] sm:$0xff]
    %v637 = vld [vmem:[%s4 + $0x40] sm:$0xff]
    %v638 = vld [vmem:[%s4 + $0x48] sm:$0xff]
    %v639 = vld [vmem:[%s4 + $0x50] sm:$0xff]
    %v640 = vld [vmem:[%s4 + $0x58] sm:$0xff]
    %v641 = vld [vmem:[%s4 + $0x60] sm:$0xff]
    %v642 = vld [vmem:[%s4 + $0x68] sm:$0xff]
    %v643 = vld [vmem:[%s4 + $0x70] sm:$0xff]
    %v644 = vld [vmem:[%s4 + $0x78] sm:$0xff]
    %v645 = vld [vmem:[%s4 + $0x80] sm:$0xff]
    %v646 = vld [vmem:[%s4 + $0x88] sm:$0xff]
    %v647 = vld [vmem:[%s4 + $0x90] sm:$0xff]
    %v648 = vld [vmem:[%s4 + $0x98] sm:$0xff]
    %v649 = vld [vmem:[%s4 + $0xa0] sm:$0xff]
    %v650 = vld [vmem:[%s4 + $0xa8] sm:$0xff]
    %v651 = vld [vmem:[%s4 + $0xb0] sm:$0xff]
    %v652 = vld [vmem:[%s4 + $0xb8] sm:$0xff]
    %v653 = vld [vmem:[%s4 + $0xc0] sm:$0xff]
    %v654 = vld [vmem:[%s4 + $0xc8] sm:$0xff]
    %v655 = vld [vmem:[%s4 + $0xd0] sm:$0xff]
    %v656 = vld [vmem:[%s4 + $0xd8] sm:$0xff]
    %v657 = vld [vmem:[%s4 + $0xe0] sm:$0xff]
    %v658 = vld [vmem:[%s4 + $0xe8] sm:$0xff]
    %v659 = vld [vmem:[%s4 + $0xf0] sm:$0xff]
    %v660 = vld [vmem:[%s4 + $0xf8] sm:$0xff]
    %662 = vset.pattern.permute.xlu0 0
    %663 = vperm.xlu0 %662, %v629
    %v664 = vpop.permute.xlu0 %663
    %667 = vset.pattern.permute.xlu0 0
    %668 = vperm.xlu0 %667, %v630
    %v669 = vpop.permute.xlu0 %668
    %672 = vset.pattern.permute.xlu0 0
    %673 = vperm.xlu0 %672, %v631
    %v674 = vpop.permute.xlu0 %673
    %677 = vset.pattern.permute.xlu0 0
    %678 = vperm.xlu0 %677, %v632
    %v679 = vpop.permute.xlu0 %678
    %682 = vset.pattern.permute.xlu0 0
    %683 = vperm.xlu0 %682, %v633
    %v684 = vpop.permute.xlu0 %683
    %687 = vset.pattern.permute.xlu0 0
    %688 = vperm.xlu0 %687, %v634
    %v689 = vpop.permute.xlu0 %688
    %692 = vset.pattern.permute.xlu0 0
    %693 = vperm.xlu0 %692, %v635
    %v694 = vpop.permute.xlu0 %693
    %697 = vset.pattern.permute.xlu0 0
    %698 = vperm.xlu0 %697, %v636
    %v699 = vpop.permute.xlu0 %698
    %702 = vset.pattern.permute.xlu0 0
    %703 = vperm.xlu0 %702, %v637
    %v704 = vpop.permute.xlu0 %703
    %707 = vset.pattern.permute.xlu0 0
    %708 = vperm.xlu0 %707, %v638
    %v709 = vpop.permute.xlu0 %708
    %712 = vset.pattern.permute.xlu0 0
    %713 = vperm.xlu0 %712, %v639
    %v714 = vpop.permute.xlu0 %713
    %717 = vset.pattern.permute.xlu0 0
    %718 = vperm.xlu0 %717, %v640
    %v719 = vpop.permute.xlu0 %718
    %722 = vset.pattern.permute.xlu0 0
    %723 = vperm.xlu0 %722, %v641
    %v724 = vpop.permute.xlu0 %723
    %727 = vset.pattern.permute.xlu0 0
    %728 = vperm.xlu0 %727, %v642
    %v729 = vpop.permute.xlu0 %728
    %732 = vset.pattern.permute.xlu0 0
    %733 = vperm.xlu0 %732, %v643
    %v734 = vpop.permute.xlu0 %733
    %737 = vset.pattern.permute.xlu0 0
    %738 = vperm.xlu0 %737, %v644
    %v739 = vpop.permute.xlu0 %738
    %742 = vset.pattern.permute.xlu0 0
    %743 = vperm.xlu0 %742, %v645
    %v744 = vpop.permute.xlu0 %743
    %747 = vset.pattern.permute.xlu0 0
    %748 = vperm.xlu0 %747, %v646
    %v749 = vpop.permute.xlu0 %748
    %752 = vset.pattern.permute.xlu0 0
    %753 = vperm.xlu0 %752, %v647
    %v754 = vpop.permute.xlu0 %753
    %757 = vset.pattern.permute.xlu0 0
    %758 = vperm.xlu0 %757, %v648
    %v759 = vpop.permute.xlu0 %758
    %762 = vset.pattern.permute.xlu0 0
    %763 = vperm.xlu0 %762, %v649
    %v764 = vpop.permute.xlu0 %763
    %767 = vset.pattern.permute.xlu0 0
    %768 = vperm.xlu0 %767, %v650
    %v769 = vpop.permute.xlu0 %768
    %772 = vset.pattern.permute.xlu0 0
    %773 = vperm.xlu0 %772, %v651
    %v774 = vpop.permute.xlu0 %773
    %777 = vset.pattern.permute.xlu0 0
    %778 = vperm.xlu0 %777, %v652
    %v779 = vpop.permute.xlu0 %778
    %782 = vset.pattern.permute.xlu0 0
    %783 = vperm.xlu0 %782, %v653
    %v784 = vpop.permute.xlu0 %783
    %787 = vset.pattern.permute.xlu0 0
    %788 = vperm.xlu0 %787, %v654
    %v789 = vpop.permute.xlu0 %788
    %792 = vset.pattern.permute.xlu0 0
    %793 = vperm.xlu0 %792, %v655
    %v794 = vpop.permute.xlu0 %793
    %797 = vset.pattern.permute.xlu0 0
    %798 = vperm.xlu0 %797, %v656
    %v799 = vpop.permute.xlu0 %798
    %802 = vset.pattern.permute.xlu0 0
    %803 = vperm.xlu0 %802, %v657
    %v804 = vpop.permute.xlu0 %803
    %807 = vset.pattern.permute.xlu0 0
    %808 = vperm.xlu0 %807, %v658
    %v809 = vpop.permute.xlu0 %808
    %812 = vset.pattern.permute.xlu0 0
    %813 = vperm.xlu0 %812, %v659
    %v814 = vpop.permute.xlu0 %813
    %817 = vset.pattern.permute.xlu0 0
    %818 = vperm.xlu0 %817, %v660
    %v819 = vpop.permute.xlu0 %818
    %v853 = vunpack.c.l.b16 %v581
    %v854 = vunpack.c.h.b16 %v581
    %v855 = vunpack.c.l.b16 %v582
    %v856 = vunpack.c.h.b16 %v582
    %v857 = vunpack.c.l.b16 %v583
    %v858 = vunpack.c.h.b16 %v583
    %v859 = vunpack.c.l.b16 %v584
    %v860 = vunpack.c.h.b16 %v584
    %v861 = vunpack.c.l.b16 %v585
    %v862 = vunpack.c.h.b16 %v585
    %v863 = vunpack.c.l.b16 %v586
    %v864 = vunpack.c.h.b16 %v586
    %v865 = vunpack.c.l.b16 %v587
    %v866 = vunpack.c.h.b16 %v587
    %v867 = vunpack.c.l.b16 %v588
    %v868 = vunpack.c.h.b16 %v588
    %v869 = vunpack.c.l.b16 %v589
    %v870 = vunpack.c.h.b16 %v589
    %v871 = vunpack.c.l.b16 %v590
    %v872 = vunpack.c.h.b16 %v590
    %v873 = vunpack.c.l.b16 %v591
    %v874 = vunpack.c.h.b16 %v591
    %v875 = vunpack.c.l.b16 %v592
    %v876 = vunpack.c.h.b16 %v592
    %v877 = vunpack.c.l.b16 %v593
    %v878 = vunpack.c.h.b16 %v593
    %v879 = vunpack.c.l.b16 %v594
    %v880 = vunpack.c.h.b16 %v594
    %v881 = vunpack.c.l.b16 %v595
    %v882 = vunpack.c.h.b16 %v595
    %v883 = vunpack.c.l.b16 %v596
    %v884 = vunpack.c.h.b16 %v596
    %v885 = vunpack.c.l.b16 %v597
    %v886 = vunpack.c.h.b16 %v597
    %v887 = vunpack.c.l.b16 %v598
    %v888 = vunpack.c.h.b16 %v598
    %v889 = vunpack.c.l.b16 %v599
    %v890 = vunpack.c.h.b16 %v599
    %v891 = vunpack.c.l.b16 %v600
    %v892 = vunpack.c.h.b16 %v600
    %v893 = vunpack.c.l.b16 %v601
    %v894 = vunpack.c.h.b16 %v601
    %v895 = vunpack.c.l.b16 %v602
    %v896 = vunpack.c.h.b16 %v602
    %v897 = vunpack.c.l.b16 %v603
    %v898 = vunpack.c.h.b16 %v603
    %v899 = vunpack.c.l.b16 %v604
    %v900 = vunpack.c.h.b16 %v604
    %v901 = vunpack.c.l.b16 %v605
    %v902 = vunpack.c.h.b16 %v605
    %v903 = vunpack.c.l.b16 %v606
    %v904 = vunpack.c.h.b16 %v606
    %v905 = vunpack.c.l.b16 %v607
    %v906 = vunpack.c.h.b16 %v607
    %v907 = vunpack.c.l.b16 %v608
    %v908 = vunpack.c.h.b16 %v608
    %v909 = vunpack.c.l.b16 %v609
    %v910 = vunpack.c.h.b16 %v609
    %v911 = vunpack.c.l.b16 %v610
    %v912 = vunpack.c.h.b16 %v610
    %v913 = vunpack.c.l.b16 %v611
    %v914 = vunpack.c.h.b16 %v611
    %v915 = vunpack.c.l.b16 %v612
    %v916 = vunpack.c.h.b16 %v612
    %v917 = vpack.c.b16 %v855, %v853
    %v918 = vpack.c.b16 %v856, %v854
    %v919 = vpack.c.b16 %v859, %v857
    %v920 = vpack.c.b16 %v860, %v858
    %v921 = vpack.c.b16 %v863, %v861
    %v922 = vpack.c.b16 %v864, %v862
    %v923 = vpack.c.b16 %v867, %v865
    %v924 = vpack.c.b16 %v868, %v866
    %v925 = vpack.c.b16 %v871, %v869
    %v926 = vpack.c.b16 %v872, %v870
    %v927 = vpack.c.b16 %v875, %v873
    %v928 = vpack.c.b16 %v876, %v874
    %v929 = vpack.c.b16 %v879, %v877
    %v930 = vpack.c.b16 %v880, %v878
    %v931 = vpack.c.b16 %v883, %v881
    %v932 = vpack.c.b16 %v884, %v882
    %v933 = vpack.c.b16 %v887, %v885
    %v934 = vpack.c.b16 %v888, %v886
    %v935 = vpack.c.b16 %v891, %v889
    %v936 = vpack.c.b16 %v892, %v890
    %v937 = vpack.c.b16 %v895, %v893
    %v938 = vpack.c.b16 %v896, %v894
    %v939 = vpack.c.b16 %v899, %v897
    %v940 = vpack.c.b16 %v900, %v898
    %v941 = vpack.c.b16 %v903, %v901
    %v942 = vpack.c.b16 %v904, %v902
    %v943 = vpack.c.b16 %v907, %v905
    %v944 = vpack.c.b16 %v908, %v906
    %v945 = vpack.c.b16 %v911, %v909
    %v946 = vpack.c.b16 %v912, %v910
    %v947 = vpack.c.b16 %v915, %v913
    %v948 = vpack.c.b16 %v916, %v914
    %981 = vmatprep.subr.bf16.mxu0 0
    %982 = vmatpush1.bf16.msra.mxu0 %v613
    %983 = vmatprep.subr.bf16.mxu0 0
    %984 = vmatpush1.bf16.msra.mxu0 %v614
    %985 = vmatprep.subr.bf16.mxu0 0
    %986 = vmatpush1.bf16.msra.mxu0 %v615
    %987 = vmatprep.subr.bf16.mxu0 0
    %988 = vmatpush1.bf16.msra.mxu0 %v616
    %989 = vmatprep.subr.bf16.mxu0 0
    %990 = vmatpush1.bf16.msra.mxu0 %v617
    %991 = vmatprep.subr.bf16.mxu0 0
    %992 = vmatpush1.bf16.msra.mxu0 %v618
    %993 = vmatprep.subr.bf16.mxu0 0
    %994 = vmatpush1.bf16.msra.mxu0 %v619
    %995 = vmatprep.subr.bf16.mxu0 0
    %996 = vmatpush1.bf16.msra.mxu0 %v620
    %997 = vmatprep.subr.bf16.mxu0 0
    %998 = vmatpush1.bf16.msra.mxu0 %v621
    %999 = vmatprep.subr.bf16.mxu0 0
    %1000 = vmatpush1.bf16.msra.mxu0 %v622
    %1001 = vmatprep.subr.bf16.mxu0 0
    %1002 = vmatpush1.bf16.msra.mxu0 %v623
    %1003 = vmatprep.subr.bf16.mxu0 0
    %1004 = vmatpush1.bf16.msra.mxu0 %v624
    %1005 = vmatprep.subr.bf16.mxu0 0
    %1006 = vmatpush1.bf16.msra.mxu0 %v625
    %1007 = vmatprep.subr.bf16.mxu0 0
    %1008 = vmatpush1.bf16.msra.mxu0 %v626
    %1009 = vmatprep.subr.bf16.mxu0 0
    %1010 = vmatpush1.bf16.msra.mxu0 %v627
    %1011 = vmatprep.subr.bf16.mxu0 0
    %1012 = vmatpush1.bf16.msra.mxu0 %v628
    %1013 = vmatprep.mubr.bf16.mxu0 %v918
    %1014 = vmatmul.mubr.bf16.gmra.mrb[0].mxu0 %v917
    %v1015 = vpop.f32.mrb[0].mxu0
    %v1016 = vadd.f32 %v664, %v1015
    %v1017 = vpop.f32.mrb[0].mxu0
    %v1018 = vpop.f32.mrb[0].mxu0
    %v1019 = vadd.f32 %v669, %v1018
    %v1020 = vpop.f32.mrb[0].mxu0
    %1021 = vmatprep.mubr.bf16.mxu0 %v920
    %1022 = vmatmul.mubr.bf16.gmra.mrb[0].mxu0 %v919
    %v1023 = vpop.f32.mrb[0].mxu0
    %v1024 = vadd.f32 %v674, %v1023
    %v1025 = vpop.f32.mrb[0].mxu0
    %v1026 = vpop.f32.mrb[0].mxu0
    %v1027 = vadd.f32 %v679, %v1026
    %v1028 = vpop.f32.mrb[0].mxu0
    %1029 = vmatprep.mubr.bf16.mxu0 %v922
    %1030 = vmatmul.mubr.bf16.gmra.mrb[0].mxu0 %v921
    %v1031 = vpop.f32.mrb[0].mxu0
    %v1032 = vadd.f32 %v684, %v1031
    %v1033 = vpop.f32.mrb[0].mxu0
    %v1034 = vpop.f32.mrb[0].mxu0
    %v1035 = vadd.f32 %v689, %v1034
    %v1036 = vpop.f32.mrb[0].mxu0
    %1037 = vmatprep.mubr.bf16.mxu0 %v924
    %1038 = vmatmul.mubr.bf16.gmra.mrb[0].mxu0 %v923
    %v1039 = vpop.f32.mrb[0].mxu0
    %v1040 = vadd.f32 %v694, %v1039
    %v1041 = vpop.f32.mrb[0].mxu0
    %v1042 = vpop.f32.mrb[0].mxu0
    %v1043 = vadd.f32 %v699, %v1042
    %v1044 = vpop.f32.mrb[0].mxu0
    %1045 = vmatprep.mubr.bf16.mxu0 %v926
    %1046 = vmatmul.mubr.bf16.gmra.mrb[0].mxu0 %v925
    %v1047 = vpop.f32.mrb[0].mxu0
    %v1048 = vadd.f32 %v704, %v1047
    %v1049 = vpop.f32.mrb[0].mxu0
    %v1050 = vpop.f32.mrb[0].mxu0
    %v1051 = vadd.f32 %v709, %v1050
    %v1052 = vpop.f32.mrb[0].mxu0
    %1053 = vmatprep.mubr.bf16.mxu0 %v928
    %1054 = vmatmul.mubr.bf16.gmra.mrb[0].mxu0 %v927
    %v1055 = vpop.f32.mrb[0].mxu0
    %v1056 = vadd.f32 %v714, %v1055
    %v1057 = vpop.f32.mrb[0].mxu0
    %v1058 = vpop.f32.mrb[0].mxu0
    %v1059 = vadd.f32 %v719, %v1058
    %v1060 = vpop.f32.mrb[0].mxu0
    %1061 = vmatprep.mubr.bf16.mxu0 %v930
    %1062 = vmatmul.mubr.bf16.gmra.mrb[0].mxu0 %v929
    %v1063 = vpop.f32.mrb[0].mxu0
    %v1064 = vadd.f32 %v724, %v1063
    %v1065 = vpop.f32.mrb[0].mxu0
    %v1066 = vpop.f32.mrb[0].mxu0
    %v1067 = vadd.f32 %v729, %v1066
    %v1068 = vpop.f32.mrb[0].mxu0
    %1069 = vmatprep.mubr.bf16.mxu0 %v932
    %1070 = vmatmul.mubr.bf16.gmra.mrb[0].mxu0 %v931
    %v1071 = vpop.f32.mrb[0].mxu0
    %v1072 = vadd.f32 %v734, %v1071
    %v1073 = vpop.f32.mrb[0].mxu0
    %v1074 = vpop.f32.mrb[0].mxu0
    %v1075 = vadd.f32 %v739, %v1074
    %v1076 = vpop.f32.mrb[0].mxu0
    %1077 = vmatprep.mubr.bf16.mxu0 %v934
    %1078 = vmatmul.mubr.bf16.gmra.mrb[0].mxu0 %v933
    %v1079 = vpop.f32.mrb[0].mxu0
    %v1080 = vadd.f32 %v744, %v1079
    %v1081 = vpop.f32.mrb[0].mxu0
    %v1082 = vpop.f32.mrb[0].mxu0
    %v1083 = vadd.f32 %v749, %v1082
    %v1084 = vpop.f32.mrb[0].mxu0
    %1085 = vmatprep.mubr.bf16.mxu0 %v936
    %1086 = vmatmul.mubr.bf16.gmra.mrb[0].mxu0 %v935
    %v1087 = vpop.f32.mrb[0].mxu0
    %v1088 = vadd.f32 %v754, %v1087
    %v1089 = vpop.f32.mrb[0].mxu0
    %v1090 = vpop.f32.mrb[0].mxu0
    %v1091 = vadd.f32 %v759, %v1090
    %v1092 = vpop.f32.mrb[0].mxu0
    %1093 = vmatprep.mubr.bf16.mxu0 %v938
    %1094 = vmatmul.mubr.bf16.gmra.mrb[0].mxu0 %v937
    %v1095 = vpop.f32.mrb[0].mxu0
    %v1096 = vadd.f32 %v764, %v1095
    %v1097 = vpop.f32.mrb[0].mxu0
    %v1098 = vpop.f32.mrb[0].mxu0
    %v1099 = vadd.f32 %v769, %v1098
    %v1100 = vpop.f32.mrb[0].mxu0
    %1101 = vmatprep.mubr.bf16.mxu0 %v940
    %1102 = vmatmul.mubr.bf16.gmra.mrb[0].mxu0 %v939
    %v1103 = vpop.f32.mrb[0].mxu0
    %v1104 = vadd.f32 %v774, %v1103
    %v1105 = vpop.f32.mrb[0].mxu0
    %v1106 = vpop.f32.mrb[0].mxu0
    %v1107 = vadd.f32 %v779, %v1106
    %v1108 = vpop.f32.mrb[0].mxu0
    %1109 = vmatprep.mubr.bf16.mxu0 %v942
    %1110 = vmatmul.mubr.bf16.gmra.mrb[0].mxu0 %v941
    %v1111 = vpop.f32.mrb[0].mxu0
    %v1112 = vadd.f32 %v784, %v1111
    %v1113 = vpop.f32.mrb[0].mxu0
    %v1114 = vpop.f32.mrb[0].mxu0
    %v1115 = vadd.f32 %v789, %v1114
    %v1116 = vpop.f32.mrb[0].mxu0
    %1117 = vmatprep.mubr.bf16.mxu0 %v944
    %1118 = vmatmul.mubr.bf16.gmra.mrb[0].mxu0 %v943
    %v1119 = vpop.f32.mrb[0].mxu0
    %v1120 = vadd.f32 %v794, %v1119
    %v1121 = vpop.f32.mrb[0].mxu0
    %v1122 = vpop.f32.mrb[0].mxu0
    %v1123 = vadd.f32 %v799, %v1122
    %v1124 = vpop.f32.mrb[0].mxu0
    %1125 = vmatprep.mubr.bf16.mxu0 %v946
    %1126 = vmatmul.mubr.bf16.gmra.mrb[0].mxu0 %v945
    %v1127 = vpop.f32.mrb[0].mxu0
    %v1128 = vadd.f32 %v804, %v1127
    %v1129 = vpop.f32.mrb[0].mxu0
    %v1130 = vpop.f32.mrb[0].mxu0
    %v1131 = vadd.f32 %v809, %v1130
    %v1132 = vpop.f32.mrb[0].mxu0
    %1133 = vmatprep.mubr.bf16.mxu0 %v948
    %1134 = vmatmul.mubr.bf16.gmra.mrb[0].mxu0 %v947
    %v1135 = vpop.f32.mrb[0].mxu0
    %v1136 = vadd.f32 %v814, %v1135
    %v1137 = vpop.f32.mrb[0].mxu0
    %v1138 = vpop.f32.mrb[0].mxu0
    %v1139 = vadd.f32 %v819, %v1138
    %v1140 = vpop.f32.mrb[0].mxu0
    %1141 = vdwg.mxu0
    %v1142 = vmax.f32 %v1016, 0.0
    %v1143 = vmax.f32 %v1019, 0.0
    %v1144 = vmax.f32 %v1024, 0.0
    %v1145 = vmax.f32 %v1027, 0.0
    %v1146 = vmax.f32 %v1032, 0.0
    %v1147 = vmax.f32 %v1035, 0.0
    %v1148 = vmax.f32 %v1040, 0.0
    %v1149 = vmax.f32 %v1043, 0.0
    %v1150 = vmax.f32 %v1048, 0.0
    %v1151 = vmax.f32 %v1051, 0.0
    %v1152 = vmax.f32 %v1056, 0.0
    %v1153 = vmax.f32 %v1059, 0.0
    %v1154 = vmax.f32 %v1064, 0.0
    %v1155 = vmax.f32 %v1067, 0.0
    %v1156 = vmax.f32 %v1072, 0.0
    %v1157 = vmax.f32 %v1075, 0.0
    %v1158 = vmax.f32 %v1080, 0.0
    %v1159 = vmax.f32 %v1083, 0.0
    %v1160 = vmax.f32 %v1088, 0.0
    %v1161 = vmax.f32 %v1091, 0.0
    %v1162 = vmax.f32 %v1096, 0.0
    %v1163 = vmax.f32 %v1099, 0.0
    %v1164 = vmax.f32 %v1104, 0.0
    %v1165 = vmax.f32 %v1107, 0.0
    %v1166 = vmax.f32 %v1112, 0.0
    %v1167 = vmax.f32 %v1115, 0.0
    %v1168 = vmax.f32 %v1120, 0.0
    %v1169 = vmax.f32 %v1123, 0.0
    %v1170 = vmax.f32 %v1128, 0.0
    %v1171 = vmax.f32 %v1131, 0.0
    %v1172 = vmax.f32 %v1136, 0.0
    %v1173 = vmax.f32 %v1139, 0.0
    %v1174 = vld [vmem:[%s5] sm:$0xff]
    %v1175 = vpack.c.bf16 %v1143, %v1142
    %v1176 = vpack.c.bf16 %v1145, %v1144
    %v1177 = vpack.c.bf16 %v1147, %v1146
    %v1178 = vpack.c.bf16 %v1149, %v1148
    %v1179 = vpack.c.bf16 %v1151, %v1150
    %v1180 = vpack.c.bf16 %v1153, %v1152
    %v1181 = vpack.c.bf16 %v1155, %v1154
    %v1182 = vpack.c.bf16 %v1157, %v1156
    %v1183 = vpack.c.bf16 %v1159, %v1158
    %v1184 = vpack.c.bf16 %v1161, %v1160
    %v1185 = vpack.c.bf16 %v1163, %v1162
    %v1186 = vpack.c.bf16 %v1165, %v1164
    %v1187 = vpack.c.bf16 %v1167, %v1166
    %v1188 = vpack.c.bf16 %v1169, %v1168
    %v1189 = vpack.c.bf16 %v1171, %v1170
    %v1190 = vpack.c.bf16 %v1173, %v1172
    %v1192 = vunpack.c.l.b16 %v1174
    %v1193 = vunpack.c.h.b16 %v1174
    %v1194 = vpack.c.b16 %v1192, %v1192
    %v1195 = vpack.c.b16 %v1193, %v1193
    %1198 = vmatprep.subr.bf16.mxu0 0
    %1199 = vmatpush1.bf16.msra.mxu0 %v1175
    %1200 = vmatprep.subr.bf16.mxu0 0
    %1201 = vmatpush1.bf16.msra.mxu0 %v1176
    %1202 = vmatprep.subr.bf16.mxu0 0
    %1203 = vmatpush1.bf16.msra.mxu0 %v1177
    %1204 = vmatprep.subr.bf16.mxu0 0
    %1205 = vmatpush1.bf16.msra.mxu0 %v1178
    %1206 = vmatprep.subr.bf16.mxu0 0
    %1207 = vmatpush1.bf16.msra.mxu0 %v1179
    %1208 = vmatprep.subr.bf16.mxu0 0
    %1209 = vmatpush1.bf16.msra.mxu0 %v1180
    %1210 = vmatprep.subr.bf16.mxu0 0
    %1211 = vmatpush1.bf16.msra.mxu0 %v1181
    %1212 = vmatprep.subr.bf16.mxu0 0
    %1213 = vmatpush1.bf16.msra.mxu0 %v1182
    %1214 = vmatprep.subr.bf16.mxu0 0
    %1215 = vmatpush1.bf16.msra.mxu0 %v1183
    %1216 = vmatprep.subr.bf16.mxu0 0
    %1217 = vmatpush1.bf16.msra.mxu0 %v1184
    %1218 = vmatprep.subr.bf16.mxu0 0
    %1219 = vmatpush1.bf16.msra.mxu0 %v1185
    %1220 = vmatprep.subr.bf16.mxu0 0
    %1221 = vmatpush1.bf16.msra.mxu0 %v1186
    %1222 = vmatprep.subr.bf16.mxu0 0
    %1223 = vmatpush1.bf16.msra.mxu0 %v1187
    %1224 = vmatprep.subr.bf16.mxu0 0
    %1225 = vmatpush1.bf16.msra.mxu0 %v1188
    %1226 = vmatprep.subr.bf16.mxu0 0
    %1227 = vmatpush1.bf16.msra.mxu0 %v1189
    %1228 = vmatprep.subr.bf16.mxu0 0
    %1229 = vmatpush1.bf16.msra.mxu0 %v1190
    %1230 = vmatprep.mubr.bf16.mxu0 %v1195
    %1231 = vmatmul.mubr.bf16.gmra.mrb[0].mxu0 %v1194
    %v1232 = vpop.f32.mrb[0].mxu0
    %v1233 = vadd.f32 0.0, %v1232
    %v1234 = vpop.f32.mrb[0].mxu0
    %v1235 = vpop.f32.mrb[0].mxu0
    %v1236 = vpop.f32.mrb[0].mxu0
    %1237 = vdwg.mxu0
    %s1238 = sld [smem:[#allocation2]]
    %v1239 = vstv %s1238
    %v1240 = vadd.f32 %v1233, %v1239
    %v1241 = vtanh.pop %v1240
    %v1242 = vmul.f32 %v1241, 2.0
    %1243 = vst [vmem:[#allocation3] sm:$0x1] %v1242
    // Predicated region
    $region30: #{tpu_custom_call.1} parent=1 // pred_check
      _
    $region31: #{tpu_custom_call.1} parent=1 // pred_check_branch
      %1245 = sbr.rel (0) target = $region33
    $region32: #{tpu_custom_call.1} parent=1 // pred_region
      %s1247 = ssub.s32 16, 16
      %1248 = vsyncadd [#allocation4], %s1247
      %s1250 = sshll.u32 [#allocation3], 4
      %s1251 = int_to_ptr.vmem [resolvable:$true] %s1250
      %1253 = dma.vmem_to_hbm [thread:$0]  %s1251, 16, %s7, [#allocation4]
    $region33: #{tpu_custom_call.1} parent=1 // pred_fallthru
      _
    // Predicated region
    $region34: #{tpu_custom_call.1} parent=1 // pred_check
      _
    $region35: #{tpu_custom_call.1} parent=1 // pred_check_branch
      %1255 = sbr.rel (0) target = $region37
    $region36: #{tpu_custom_call.1} parent=1 // pred_region
      %1256 = dma.done [#allocation4], 16
    $region37: #{tpu_custom_call.1} parent=1 // pred_fallthru
      _
    %1257 = vsyncpa [#allocation4], 1

</llo_original>
